<compile_context>
chip_gen: v7x
topology: tpu7x:2x2x1
jax: 0.10.0
libtpu: 0.0.40
codegen_flags: <defaults>
</compile_context>

<pallas_src>
import functools

import jax
import jax.numpy as jnp
from jax import lax
from jax.experimental import pallas as pl
from jax.experimental.pallas import tpu as pltpu


def _mlp_kernel(x_ref, w1_ref, b1_ref, w2_ref, b2_ref, w3_ref, b3_ref,
                w4_ref, b4_ref, o_ref, *, sub, n_inner, out_dim):
    # x_ref : [tile, in_dim]  batch-major block (tile = sub * n_inner)
    # w1    : [hid, in_dim] f32      w2, w3: [hid, hid] bf16
    # w4    : [out_pad, hid] bf16 (zero-padded rows beyond out_dim)
    # b1..b3: [hid, 1] f32           b4    : [out_pad, 1] f32
    # o_ref : [tile, out_dim] batch-major block
    w1 = w1_ref[...]
    w2 = w2_ref[...]
    w3 = w3_ref[...]
    w4 = w4_ref[...]
    b1 = b1_ref[...]
    b2 = b2_ref[...]
    b3 = b3_ref[...]
    b4 = b4_ref[...]

    def body(c, carry):
        off = pl.multiple_of(c * sub, 128)
        x_sub = x_ref[pl.ds(off, sub), :]                        # [sub, in] f32

        # fc1 (+ layout flip): W1 @ x_sub^T -> feature-major [hid, sub].
        h = lax.dot_general(w1, x_sub, (((1,), (1,)), ((), ())),
                            preferred_element_type=jnp.float32)
        h = jnp.maximum(h + b1, 0.0)                             # relu1 (f32)

        # fc2 / fc3: bf16 MXU operands, f32 accumulate, f32 bias + ReLU.
        h = jnp.dot(w2, h.astype(jnp.bfloat16),
                    preferred_element_type=jnp.float32)
        h = jnp.maximum(h + b2, 0.0)
        h = jnp.dot(w3, h.astype(jnp.bfloat16),
                    preferred_element_type=jnp.float32)
        h = jnp.maximum(h + b3, 0.0)

        # fc4 -> [out_pad, sub]; one small aligned in-kernel transpose gives the
        # batch-major tile, padded rows are sliced away before the store.
        y = jnp.dot(w4, h.astype(jnp.bfloat16),
                    preferred_element_type=jnp.float32) + b4
        y_bm = y.T[:, :out_dim]                                  # [sub, out]
        o_ref[pl.ds(off, sub), :] = y_bm.astype(o_ref.dtype)
        return carry

    lax.fori_loop(0, n_inner, body, 0, unroll=True)


def _round_up(n, m):
    return ((n + m - 1) // m) * m


def prepare_params(params):
    """One-time conversion of PyTorch-layout params into kernel-ready form."""
    hid = params["w1"].shape[0]
    out_dim = params["w4"].shape[0]
    out_pad = _round_up(max(out_dim, 8), 8)          # aligned transpose source
    return {
        "w1": params["w1"].astype(jnp.float32),
        "w2": params["w2"].astype(jnp.bfloat16),
        "w3": params["w3"].astype(jnp.bfloat16),
        "w4": jnp.zeros((out_pad, hid), jnp.bfloat16)
                 .at[:out_dim, :].set(params["w4"].astype(jnp.bfloat16)),
        "b1": params["b1"].astype(jnp.float32).reshape(hid, 1),
        "b2": params["b2"].astype(jnp.float32).reshape(hid, 1),
        "b3": params["b3"].astype(jnp.float32).reshape(hid, 1),
        "b4": jnp.zeros((out_pad, 1), jnp.float32)
                 .at[:out_dim, :].set(params["b4"].astype(jnp.float32).reshape(out_dim, 1)),
    }


@functools.partial(jax.jit, static_argnames=("out_dim", "sub_tile", "max_unroll"))
def tictactoe_net_forward(x, kparams, *, out_dim, sub_tile=512, max_unroll=4):
    """x: [B, input_size] f32 (batch-major, PyTorch semantics). Returns [B, out_dim]."""
    w1, b1 = kparams["w1"], kparams["b1"]
    w2, b2 = kparams["w2"], kparams["b2"]
    w3, b3 = kparams["w3"], kparams["b3"]
    w4, b4 = kparams["w4"], kparams["b4"]

    B, in_dim = x.shape
    hid = w1.shape[0]
    out_pad = w4.shape[0]

    # --- batch tiling ------------------------------------------------------
    # sub:    lane width of one inner sub-slice (feature-major h = [hid, sub]).
    # unroll: sub-slices per grid step, amortising the ~0.35 us/step fixed cost.
    # grid:   kept >= 2 steps whenever >= 2 sub-slices exist so "parallel"
    #         semantics can use both v7x TensorCores (no-op on v5e/v6e).
    b128 = _round_up(B, 128)
    sub = min(_round_up(sub_tile, 128), b128)
    n_sub_total = -(-b128 // sub)
    n_steps = max(1, -(-n_sub_total // max_unroll))
    if n_sub_total >= 2:
        n_steps = max(n_steps, 2)
    unroll = -(-n_sub_total // n_steps)
    tile = sub * unroll
    b_pad = n_steps * tile
    grid = (n_steps,)

    x_p = jnp.pad(x, ((0, b_pad - B), (0, 0)))       # zero rows, sliced off below

    kernel = functools.partial(_mlp_kernel, sub=sub, n_inner=unroll,
                               out_dim=out_dim)

    def batch_map(i):
        return (i, 0)

    def const_map(i):
        return (0, 0)          # weights/biases stay VMEM-resident across steps

    out = pl.pallas_call(
        kernel,
        out_shape=jax.ShapeDtypeStruct((b_pad, out_dim), x.dtype),
        grid_spec=pl.GridSpec(
            grid=grid,
            in_specs=[
                pl.BlockSpec((tile, in_dim), batch_map),     # x (batch-major)
                pl.BlockSpec((hid, in_dim), const_map),      # w1 (f32)
                pl.BlockSpec((hid, 1), const_map),           # b1
                pl.BlockSpec((hid, hid), const_map),         # w2 (bf16)
                pl.BlockSpec((hid, 1), const_map),           # b2
                pl.BlockSpec((hid, hid), const_map),         # w3 (bf16)
                pl.BlockSpec((hid, 1), const_map),           # b3
                pl.BlockSpec((out_pad, hid), const_map),     # w4 (bf16, padded)
                pl.BlockSpec((out_pad, 1), const_map),       # b4 (padded)
            ],
            out_specs=pl.BlockSpec((tile, out_dim), batch_map),
        ),
        compiler_params=pltpu.CompilerParams(
            dimension_semantics=("parallel",)),
    )(x_p, w1, b1, w2, b2, w3, b3, w4, b4)

    return out[:B]


def init_params(key, input_size, hidden_size, output_size, dtype=jnp.float32):
    """PyTorch-like uniform(-1/sqrt(fan_in), +) init, [out, in] weights, [out] biases."""
    dims = [(input_size, hidden_size), (hidden_size, hidden_size),
            (hidden_size, hidden_size), (hidden_size, output_size)]
    params = {}
    for idx, (fan_in, fan_out) in enumerate(dims, start=1):
        key, kw, kb = jax.random.split(key, 3)
        bound = 1.0 / (fan_in ** 0.5)
        params[f"w{idx}"] = jax.random.uniform(
            kw, (fan_out, fan_in), dtype, minval=-bound, maxval=bound)
        params[f"b{idx}"] = jax.random.uniform(
            kb, (fan_out,), dtype, minval=-bound, maxval=bound)
    return params


def _reference_forward(x, params):
    h = x
    for i in range(1, 4):
        h = jnp.maximum(h @ params[f"w{i}"].T + params[f"b{i}"], 0.0)
    return h @ params["w4"].T + params["b4"]


if __name__ == "__main__":
    # Tic-tac-toe: 9-cell board in, 9 move logits out.
    input_size, hidden_size, output_size = 9, 32, 9
    batch = 8

    key = jax.random.PRNGKey(0)
    key, kx = jax.random.split(key)
    x = jax.random.normal(kx, (batch, input_size), jnp.float32)
    params = init_params(key, input_size, hidden_size, output_size)

    kparams = prepare_params(params)                 # one-time weight prep
    out = tictactoe_net_forward(x, kparams, out_dim=output_size)
    out = jax.block_until_ready(out)

    ref = _reference_forward(x, params)
    assert out.shape == (batch, output_size)
    # fc2-fc4 use bf16 MXU operands (f32 accumulation), so compare against the
    # pure-f32 reference with a bf16-appropriate tolerance.
    assert jnp.allclose(out, ref, atol=2e-2, rtol=2e-2), "mismatch vs reference"

    print("KERNEL_OK")
</pallas_src>

<mosaic_0001>
module attributes {stable_mosaic.version = 11 : i64} {
  func.func @_mlp_kernel(%arg0: i32, %arg1: memref<128x9xf32, #tpu.memory_space<vmem>>, %arg2: memref<32x9xf32, #tpu.memory_space<vmem>>, %arg3: memref<32x1xf32, #tpu.memory_space<vmem>>, %arg4: memref<32x32xbf16, #tpu.memory_space<vmem>>, %arg5: memref<32x1xf32, #tpu.memory_space<vmem>>, %arg6: memref<32x32xbf16, #tpu.memory_space<vmem>>, %arg7: memref<32x1xf32, #tpu.memory_space<vmem>>, %arg8: memref<16x32xbf16, #tpu.memory_space<vmem>>, %arg9: memref<16x1xf32, #tpu.memory_space<vmem>>, %arg10: memref<128x9xf32, #tpu.memory_space<vmem>>) attributes {dimension_semantics = [#tpu.dimension_semantics<parallel>], iteration_bounds = array<i64: 1>, scalar_prefetch = 0 : i64, scratch_operands = 0 : i64, tpu.core_type = #tpu.core_type<tc>, window_params = [{transform_indices = @transform_0, window_bounds = array<i64: 128, 9>}, {pipeline_mode = #tpu.pipeline_mode<synchronous>, transform_indices = @transform_1, window_bounds = array<i64: 32, 9>}, {pipeline_mode = #tpu.pipeline_mode<synchronous>, transform_indices = @transform_2, window_bounds = array<i64: 32, 1>}, {pipeline_mode = #tpu.pipeline_mode<synchronous>, transform_indices = @transform_3, window_bounds = array<i64: 32, 32>}, {pipeline_mode = #tpu.pipeline_mode<synchronous>, transform_indices = @transform_4, window_bounds = array<i64: 32, 1>}, {pipeline_mode = #tpu.pipeline_mode<synchronous>, transform_indices = @transform_5, window_bounds = array<i64: 32, 32>}, {pipeline_mode = #tpu.pipeline_mode<synchronous>, transform_indices = @transform_6, window_bounds = array<i64: 32, 1>}, {pipeline_mode = #tpu.pipeline_mode<synchronous>, transform_indices = @transform_7, window_bounds = array<i64: 16, 32>}, {pipeline_mode = #tpu.pipeline_mode<synchronous>, transform_indices = @transform_8, window_bounds = array<i64: 16, 1>}, {transform_indices = @transform_9, window_bounds = array<i64: 128, 9>}]} {
    %c0 = arith.constant 0 : index
    %c0_0 = arith.constant 0 : index
    %0 = vector.load %arg2[%c0, %c0_0] : memref<32x9xf32, #tpu.memory_space<vmem>>, vector<32x9xf32>
    %c0_1 = arith.constant 0 : index
    %c0_2 = arith.constant 0 : index
    %1 = vector.load %arg4[%c0_1, %c0_2] : memref<32x32xbf16, #tpu.memory_space<vmem>>, vector<32x32xbf16>
    %c0_3 = arith.constant 0 : index
    %c0_4 = arith.constant 0 : index
    %2 = vector.load %arg6[%c0_3, %c0_4] : memref<32x32xbf16, #tpu.memory_space<vmem>>, vector<32x32xbf16>
    %c0_5 = arith.constant 0 : index
    %c0_6 = arith.constant 0 : index
    %3 = vector.load %arg8[%c0_5, %c0_6] : memref<16x32xbf16, #tpu.memory_space<vmem>>, vector<16x32xbf16>
    %c0_7 = arith.constant 0 : index
    %c0_8 = arith.constant 0 : index
    %4 = vector.load %arg3[%c0_7, %c0_8] : memref<32x1xf32, #tpu.memory_space<vmem>>, vector<32x1xf32>
    %c0_9 = arith.constant 0 : index
    %c0_10 = arith.constant 0 : index
    %5 = vector.load %arg5[%c0_9, %c0_10] : memref<32x1xf32, #tpu.memory_space<vmem>>, vector<32x1xf32>
    %c0_11 = arith.constant 0 : index
    %c0_12 = arith.constant 0 : index
    %6 = vector.load %arg7[%c0_11, %c0_12] : memref<32x1xf32, #tpu.memory_space<vmem>>, vector<32x1xf32>
    %c0_13 = arith.constant 0 : index
    %c0_14 = arith.constant 0 : index
    %7 = vector.load %arg9[%c0_13, %c0_14] : memref<16x1xf32, #tpu.memory_space<vmem>>, vector<16x1xf32>
    %c0_i32 = arith.constant 0 : i32
    %c128_i32 = arith.constant 128 : i32
    %8 = arith.muli %c0_i32, %c128_i32 : i32
    %9 = tpu.assume_multiple %8, 128 : i32
    %10 = arith.index_cast %9 : i32 to index
    %c0_15 = arith.constant 0 : index
    %11 = vector.load %arg1[%10, %c0_15] : memref<128x9xf32, #tpu.memory_space<vmem>>, vector<128x9xf32>
    %cst = arith.constant dense<0.000000e+00> : vector<32x128xf32>
    %12 = tpu.matmul %0, %11, %cst {dimension_numbers = #tpu.dot_dimension_numbers<[1], [1], [0], [0], [0, 0, 1, 0], [], []>} : vector<32x9xf32>, vector<128x9xf32>, vector<32x128xf32> -> vector<32x128xf32>
    %13 = vector.broadcast %4 : vector<32x1xf32> to vector<32x128xf32>
    %14 = arith.addf %12, %13 : vector<32x128xf32>
    %cst_16 = arith.constant 0.000000e+00 : f32
    %15 = vector.broadcast %cst_16 : f32 to vector<32x128xf32>
    %16 = arith.maximumf %14, %15 : vector<32x128xf32>
    %17 = arith.truncf %16 : vector<32x128xf32> to vector<32x128xbf16>
    %cst_17 = arith.constant dense<0.000000e+00> : vector<32x128xf32>
    %18 = tpu.matmul %1, %17, %cst_17 {dimension_numbers = #tpu.dot_dimension_numbers<[1], [0], [0], [1], [0, 0, 1, 1], [], []>} : vector<32x32xbf16>, vector<32x128xbf16>, vector<32x128xf32> -> vector<32x128xf32>
    %19 = vector.broadcast %5 : vector<32x1xf32> to vector<32x128xf32>
    %20 = arith.addf %18, %19 : vector<32x128xf32>
    %cst_18 = arith.constant 0.000000e+00 : f32
    %21 = vector.broadcast %cst_18 : f32 to vector<32x128xf32>
    %22 = arith.maximumf %20, %21 : vector<32x128xf32>
    %23 = arith.truncf %22 : vector<32x128xf32> to vector<32x128xbf16>
    %cst_19 = arith.constant dense<0.000000e+00> : vector<32x128xf32>
    %24 = tpu.matmul %2, %23, %cst_19 {dimension_numbers = #tpu.dot_dimension_numbers<[1], [0], [0], [1], [0, 0, 1, 1], [], []>} : vector<32x32xbf16>, vector<32x128xbf16>, vector<32x128xf32> -> vector<32x128xf32>
    %25 = vector.broadcast %6 : vector<32x1xf32> to vector<32x128xf32>
    %26 = arith.addf %24, %25 : vector<32x128xf32>
    %cst_20 = arith.constant 0.000000e+00 : f32
    %27 = vector.broadcast %cst_20 : f32 to vector<32x128xf32>
    %28 = arith.maximumf %26, %27 : vector<32x128xf32>
    %29 = arith.truncf %28 : vector<32x128xf32> to vector<32x128xbf16>
    %cst_21 = arith.constant dense<0.000000e+00> : vector<16x128xf32>
    %30 = tpu.matmul %3, %29, %cst_21 {dimension_numbers = #tpu.dot_dimension_numbers<[1], [0], [0], [1], [0, 0, 1, 1], [], []>} : vector<16x32xbf16>, vector<32x128xbf16>, vector<16x128xf32> -> vector<16x128xf32>
    %31 = vector.broadcast %7 : vector<16x1xf32> to vector<16x128xf32>
    %32 = arith.addf %30, %31 : vector<16x128xf32>
    %33 = tpu.transpose %32, [1, 0] : vector<16x128xf32> -> vector<128x16xf32>
    %34 = vector.extract_strided_slice %33 {offsets = [0, 0], sizes = [128, 9], strides = [1, 1]} : vector<128x16xf32> to vector<128x9xf32>
    %35 = arith.index_cast %9 : i32 to index
    %c0_22 = arith.constant 0 : index
    %36 = vector.load %arg10[%35, %c0_22] : memref<128x9xf32, #tpu.memory_space<vmem>>, vector<128x9xf32>
    tpu.vector_store %arg10[%35, %c0_22], %34 {strides = array<i32>} : memref<128x9xf32, #tpu.memory_space<vmem>>, vector<128x9xf32>,
    %c1_i32 = arith.constant 1 : i32
    return
  }
  func.func @transform_0(%arg0: i32) -> (i32, i32) {
    %c0_i32 = arith.constant 0 : i32
    %c0_i32_0 = arith.constant 0 : i32
    return %arg0, %c0_i32 : i32, i32
  }
  func.func @transform_1(%arg0: i32) -> (i32, i32) {
    %c0_i32 = arith.constant 0 : i32
    %c0_i32_0 = arith.constant 0 : i32
    %c0_i32_1 = arith.constant 0 : i32
    return %c0_i32, %c0_i32_0 : i32, i32
  }
  func.func @transform_2(%arg0: i32) -> (i32, i32) {
    %c0_i32 = arith.constant 0 : i32
    %c0_i32_0 = arith.constant 0 : i32
    %c0_i32_1 = arith.constant 0 : i32
    return %c0_i32, %c0_i32_0 : i32, i32
  }
  func.func @transform_3(%arg0: i32) -> (i32, i32) {
    %c0_i32 = arith.constant 0 : i32
    %c0_i32_0 = arith.constant 0 : i32
    %c0_i32_1 = arith.constant 0 : i32
    return %c0_i32, %c0_i32_0 : i32, i32
  }
  func.func @transform_4(%arg0: i32) -> (i32, i32) {
    %c0_i32 = arith.constant 0 : i32
    %c0_i32_0 = arith.constant 0 : i32
    %c0_i32_1 = arith.constant 0 : i32
    return %c0_i32, %c0_i32_0 : i32, i32
  }
  func.func @transform_5(%arg0: i32) -> (i32, i32) {
    %c0_i32 = arith.constant 0 : i32
    %c0_i32_0 = arith.constant 0 : i32
    %c0_i32_1 = arith.constant 0 : i32
    return %c0_i32, %c0_i32_0 : i32, i32
  }
  func.func @transform_6(%arg0: i32) -> (i32, i32) {
    %c0_i32 = arith.constant 0 : i32
    %c0_i32_0 = arith.constant 0 : i32
    %c0_i32_1 = arith.constant 0 : i32
    return %c0_i32, %c0_i32_0 : i32, i32
  }
  func.func @transform_7(%arg0: i32) -> (i32, i32) {
    %c0_i32 = arith.constant 0 : i32
    %c0_i32_0 = arith.constant 0 : i32
    %c0_i32_1 = arith.constant 0 : i32
    return %c0_i32, %c0_i32_0 : i32, i32
  }
  func.func @transform_8(%arg0: i32) -> (i32, i32) {
    %c0_i32 = arith.constant 0 : i32
    %c0_i32_0 = arith.constant 0 : i32
    %c0_i32_1 = arith.constant 0 : i32
    return %c0_i32, %c0_i32_0 : i32, i32
  }
  func.func @transform_9(%arg0: i32) -> (i32, i32) {
    %c0_i32 = arith.constant 0 : i32
    %c0_i32_0 = arith.constant 0 : i32
    return %arg0, %c0_i32 : i32, i32
  }
}

</mosaic_0001>

<llo_original>
// kernel: tictactoe_net_forward.1
$region0: #{tictactoe_net_forward.1}
  #allocation0 [shape = 'u32[]', space=smem, size = 0x4, offset = 0x4, fixed_abs, tag = 'smem constant byte address 0x4 - core index']
  #allocation1 [shape = 'u32[144,128]{1,0:T(1,128)}', space=vmem, size = 0x12000, scoped, tag = 'internal scratch']
  %s0 = inlined_call_operand.vmem [shape: f32[128,9], index: 0, kind: input, shape index: {}]
  %s1 = inlined_call_operand.vmem [shape: f32[32,9], index: 1, kind: input, shape index: {}]
  %s2 = inlined_call_operand.vmem [shape: f32[32,1], index: 2, kind: input, shape index: {}]
  %s3 = inlined_call_operand.vmem [shape: bf16[32,32], index: 3, kind: input, shape index: {}]
  %s4 = inlined_call_operand.vmem [shape: f32[32,1], index: 4, kind: input, shape index: {}]
  %s5 = inlined_call_operand.vmem [shape: bf16[32,32], index: 5, kind: input, shape index: {}]
  %s6 = inlined_call_operand.vmem [shape: f32[32,1], index: 6, kind: input, shape index: {}]
  %s7 = inlined_call_operand.vmem [shape: bf16[16,32], index: 7, kind: input, shape index: {}]
  %s8 = inlined_call_operand.vmem [shape: f32[16,1], index: 8, kind: input, shape index: {}]
  %s9 = inlined_call_operand.vmem [shape: f32[128,9], index: 9, kind: output, shape index: {}]
  %s10 = sld [smem:[#allocation0]]
  $region46: #{tictactoe_net_forward.1} parent=0
    _
  %s12 = ssub.s32 1, %s10
  %s13 = scalar_select 0, %s12, %s10
  // Predicated region
  $region2: #{tictactoe_net_forward.1} parent=0 // pred_check
    _
  $region3: #{tictactoe_net_forward.1} parent=0 // pred_check_branch
    %15 = sbr.rel (0) target = $region5
  $region4: #{tictactoe_net_forward.1} parent=0 // pred_region
    _
  $region5: #{tictactoe_net_forward.1} parent=0 // pred_fallthru
    _
  // Predicated region
  $region6: #{tictactoe_net_forward.1} parent=0 // pred_check
    _
  $region7: #{tictactoe_net_forward.1} parent=0 // pred_check_branch
    %17 = sbr.rel (0) target = $region9
  $region8: #{tictactoe_net_forward.1} parent=0 // pred_region
    _
  $region9: #{tictactoe_net_forward.1} parent=0 // pred_fallthru
    _
  // Predicated region
  $region10: #{tictactoe_net_forward.1} parent=0 // pred_check
    _
  $region11: #{tictactoe_net_forward.1} parent=0 // pred_check_branch
    %19 = sbr.rel (0) target = $region13
  $region12: #{tictactoe_net_forward.1} parent=0 // pred_region
    _
  $region13: #{tictactoe_net_forward.1} parent=0 // pred_fallthru
    _
  // Predicated region
  $region14: #{tictactoe_net_forward.1} parent=0 // pred_check
    _
  $region15: #{tictactoe_net_forward.1} parent=0 // pred_check_branch
    %21 = sbr.rel (0) target = $region17
  $region16: #{tictactoe_net_forward.1} parent=0 // pred_region
    _
  $region17: #{tictactoe_net_forward.1} parent=0 // pred_fallthru
    _
  // Predicated region
  $region18: #{tictactoe_net_forward.1} parent=0 // pred_check
    _
  $region19: #{tictactoe_net_forward.1} parent=0 // pred_check_branch
    %23 = sbr.rel (0) target = $region21
  $region20: #{tictactoe_net_forward.1} parent=0 // pred_region
    _
  $region21: #{tictactoe_net_forward.1} parent=0 // pred_fallthru
    _
  // Predicated region
  $region22: #{tictactoe_net_forward.1} parent=0 // pred_check
    _
  $region23: #{tictactoe_net_forward.1} parent=0 // pred_check_branch
    %25 = sbr.rel (0) target = $region25
  $region24: #{tictactoe_net_forward.1} parent=0 // pred_region
    _
  $region25: #{tictactoe_net_forward.1} parent=0 // pred_fallthru
    _
  // Predicated region
  $region26: #{tictactoe_net_forward.1} parent=0 // pred_check
    _
  $region27: #{tictactoe_net_forward.1} parent=0 // pred_check_branch
    %27 = sbr.rel (0) target = $region29
  $region28: #{tictactoe_net_forward.1} parent=0 // pred_region
    _
  $region29: #{tictactoe_net_forward.1} parent=0 // pred_fallthru
    _
  // Predicated region
  $region30: #{tictactoe_net_forward.1} parent=0 // pred_check
    _
  $region31: #{tictactoe_net_forward.1} parent=0 // pred_check_branch
    %29 = sbr.rel (0) target = $region33
  $region32: #{tictactoe_net_forward.1} parent=0 // pred_region
    _
  $region33: #{tictactoe_net_forward.1} parent=0 // pred_fallthru
    _
  // Predicated region
  $region34: #{tictactoe_net_forward.1} parent=0 // pred_check
    _
  $region35: #{tictactoe_net_forward.1} parent=0 // pred_check_branch
    %31 = sbr.rel (0) target = $region37
  $region36: #{tictactoe_net_forward.1} parent=0 // pred_region
    _
  $region37: #{tictactoe_net_forward.1} parent=0 // pred_fallthru
    _
  %v33 = vld [vmem:[%s1] sm:$0xff]
  %v34 = vld [vmem:[%s1 + $0x8] sm:$0xff]
  %v35 = vld [vmem:[%s1 + $0x10] sm:$0xff]
  %v36 = vld [vmem:[%s1 + $0x18] sm:$0xff]
  %v37 = vld [vmem:[%s3] sm:$0xf]
  %v38 = vld [vmem:[%s3 + $0x4] sm:$0xf]
  %v39 = vld [vmem:[%s3 + $0x8] sm:$0xf]
  %v40 = vld [vmem:[%s3 + $0xc] sm:$0xf]
  %v41 = vld [vmem:[%s5] sm:$0xf]
  %v42 = vld [vmem:[%s5 + $0x4] sm:$0xf]
  %v43 = vld [vmem:[%s5 + $0x8] sm:$0xf]
  %v44 = vld [vmem:[%s5 + $0xc] sm:$0xf]
  %v45 = vld [vmem:[%s7] sm:$0xf]
  %v46 = vld [vmem:[%s7 + $0x4] sm:$0xf]
  %v47 = vld [vmem:[%s2] sm:$0xff]
  %v48 = vld [vmem:[%s2 + $0x8] sm:$0xff]
  %v49 = vld [vmem:[%s2 + $0x10] sm:$0xff]
  %v50 = vld [vmem:[%s2 + $0x18] sm:$0xff]
  %v51 = vld [vmem:[%s4] sm:$0xff]
  %v52 = vld [vmem:[%s4 + $0x8] sm:$0xff]
  %v53 = vld [vmem:[%s4 + $0x10] sm:$0xff]
  %v54 = vld [vmem:[%s4 + $0x18] sm:$0xff]
  %v55 = vld [vmem:[%s6] sm:$0xff]
  %v56 = vld [vmem:[%s6 + $0x8] sm:$0xff]
  %v57 = vld [vmem:[%s6 + $0x10] sm:$0xff]
  %v58 = vld [vmem:[%s6 + $0x18] sm:$0xff]
  %v59 = vld [vmem:[%s8] sm:$0xff]
  %v60 = vld [vmem:[%s8 + $0x8] sm:$0xff]
  %v61 = vld [vmem:[%s0] sm:$0xff]
  %v62 = vld [vmem:[%s0 + $0x8] sm:$0xff]
  %v63 = vld [vmem:[%s0 + $0x10] sm:$0xff]
  %v64 = vld [vmem:[%s0 + $0x18] sm:$0xff]
  %v65 = vld [vmem:[%s0 + $0x20] sm:$0xff]
  %v66 = vld [vmem:[%s0 + $0x28] sm:$0xff]
  %v67 = vld [vmem:[%s0 + $0x30] sm:$0xff]
  %v68 = vld [vmem:[%s0 + $0x38] sm:$0xff]
  %v69 = vld [vmem:[%s0 + $0x40] sm:$0xff]
  %v70 = vld [vmem:[%s0 + $0x48] sm:$0xff]
  %v71 = vld [vmem:[%s0 + $0x50] sm:$0xff]
  %v72 = vld [vmem:[%s0 + $0x58] sm:$0xff]
  %v73 = vld [vmem:[%s0 + $0x60] sm:$0xff]
  %v74 = vld [vmem:[%s0 + $0x68] sm:$0xff]
  %v75 = vld [vmem:[%s0 + $0x70] sm:$0xff]
  %v76 = vld [vmem:[%s0 + $0x78] sm:$0xff]
  %78 = vset.pattern.permute.xlu0 0
  %79 = vperm.xlu0 %78, %v47
  %v80 = vpop.permute.xlu0 %79
  %83 = vset.pattern.permute.xlu0 0
  %84 = vperm.xlu0 %83, %v48
  %v85 = vpop.permute.xlu0 %84
  %88 = vset.pattern.permute.xlu0 0
  %89 = vperm.xlu0 %88, %v49
  %v90 = vpop.permute.xlu0 %89
  %93 = vset.pattern.permute.xlu0 0
  %94 = vperm.xlu0 %93, %v50
  %v95 = vpop.permute.xlu0 %94
  %vm97 = vcmask 72704
  %v99 = vsel %vm97, %v33, 0
  %v102 = vsel %vm97, %v34, 0
  %v105 = vsel %vm97, %v35, 0
  %v108 = vsel %vm97, %v36, 0
  %v111 = vsel %vm97, %v61, 0
  %v114 = vsel %vm97, %v62, 0
  %v117 = vsel %vm97, %v63, 0
  %v120 = vsel %vm97, %v64, 0
  %v123 = vsel %vm97, %v65, 0
  %v126 = vsel %vm97, %v66, 0
  %v129 = vsel %vm97, %v67, 0
  %v132 = vsel %vm97, %v68, 0
  %v135 = vsel %vm97, %v69, 0
  %v138 = vsel %vm97, %v70, 0
  %v141 = vsel %vm97, %v71, 0
  %v144 = vsel %vm97, %v72, 0
  %v147 = vsel %vm97, %v73, 0
  %v150 = vsel %vm97, %v74, 0
  %v153 = vsel %vm97, %v75, 0
  %v156 = vsel %vm97, %v76, 0
  %158 = vmatprep.subr.mxu0 0.0
  %159 = vmatpush1.xpose.msra.mxu0 %v111
  %160 = vmatprep.subr.mxu0 0.0
  %161 = vmatpush1.xpose.msra.mxu0 %v114
  %162 = vmatprep.subr.mxu0 0.0
  %163 = vmatpush1.xpose.msra.mxu0 %v117
  %164 = vmatprep.subr.mxu0 0.0
  %165 = vmatpush1.xpose.msra.mxu0 %v120
  %166 = vmatprep.subr.mxu0 0.0
  %167 = vmatpush1.xpose.msra.mxu0 %v123
  %168 = vmatprep.subr.mxu0 0.0
  %169 = vmatpush1.xpose.msra.mxu0 %v126
  %170 = vmatprep.subr.mxu0 0.0
  %171 = vmatpush1.xpose.msra.mxu0 %v129
  %172 = vmatprep.subr.mxu0 0.0
  %173 = vmatpush1.xpose.msra.mxu0 %v132
  %174 = vmatprep.subr.mxu0 0.0
  %175 = vmatpush1.xpose.msra.mxu0 %v135
  %176 = vmatprep.subr.mxu0 0.0
  %177 = vmatpush1.xpose.msra.mxu0 %v138
  %178 = vmatprep.subr.mxu0 0.0
  %179 = vmatpush1.xpose.msra.mxu0 %v141
  %180 = vmatprep.subr.mxu0 0.0
  %181 = vmatpush1.xpose.msra.mxu0 %v144
  %182 = vmatprep.subr.mxu0 0.0
  %183 = vmatpush1.xpose.msra.mxu0 %v147
  %184 = vmatprep.subr.mxu0 0.0
  %185 = vmatpush1.xpose.msra.mxu0 %v150
  %186 = vmatprep.subr.mxu0 0.0
  %187 = vmatpush1.xpose.msra.mxu0 %v153
  %188 = vmatprep.subr.mxu0 0.0
  %189 = vmatpush1.xpose.msra.mxu0 %v156
  %190 = vmatprep.subr.mxu0 0.0
  %191 = vmatpush1.xpose.msra.mxu0 0.0
  %192 = vmatprep.subr.mxu0 0.0
  %193 = vmatpush1.xpose.msra.mxu0 0.0
  %194 = vmatprep.subr.mxu0 0.0
  %195 = vmatpush1.xpose.msra.mxu0 0.0
  %196 = vmatprep.subr.mxu0 0.0
  %197 = vmatpush1.xpose.msra.mxu0 0.0
  %198 = vmatprep.subr.mxu0 0.0
  %199 = vmatpush1.xpose.msra.mxu0 0.0
  %200 = vmatprep.subr.mxu0 0.0
  %201 = vmatpush1.xpose.msra.mxu0 0.0
  %202 = vmatprep.subr.mxu0 0.0
  %203 = vmatpush1.xpose.msra.mxu0 0.0
  %204 = vmatprep.subr.mxu0 0.0
  %205 = vmatpush1.xpose.msra.mxu0 0.0
  %206 = vmatprep.subr.mxu0 0.0
  %207 = vmatpush1.xpose.msra.mxu0 0.0
  %208 = vmatprep.subr.mxu0 0.0
  %209 = vmatpush1.xpose.msra.mxu0 0.0
  %210 = vmatprep.subr.mxu0 0.0
  %211 = vmatpush1.xpose.msra.mxu0 0.0
  %212 = vmatprep.subr.mxu0 0.0
  %213 = vmatpush1.xpose.msra.mxu0 0.0
  %214 = vmatprep.subr.mxu0 0.0
  %215 = vmatpush1.xpose.msra.mxu0 0.0
  %216 = vmatprep.subr.mxu0 0.0
  %217 = vmatpush1.xpose.msra.mxu0 0.0
  %218 = vmatprep.subr.mxu0 0.0
  %219 = vmatpush1.xpose.msra.mxu0 0.0
  %220 = vmatprep.subr.mxu0 0.0
  %221 = vmatpush1.xpose.msra.mxu0 0.0
  %222 = vmatprep.mubr.f32.mxu0 0.0
  %223 = vmatmul.mubr.f32.gmra.mrb[0].mxu0 %v99
  %v224 = vpop.f32.mrb[0].mxu0
  %v225 = vadd.f32 %v80, %v224
  %v226 = vpop.f32.mrb[0].mxu0
  %227 = vmatprep.mubr.f32.mxu0 0.0
  %228 = vmatmul.mubr.f32.gmra.mrb[0].mxu0 %v102
  %v229 = vpop.f32.mrb[0].mxu0
  %v230 = vadd.f32 %v85, %v229
  %v231 = vpop.f32.mrb[0].mxu0
  %232 = vmatprep.mubr.f32.mxu0 0.0
  %233 = vmatmul.mubr.f32.gmra.mrb[0].mxu0 %v105
  %v234 = vpop.f32.mrb[0].mxu0
  %v235 = vadd.f32 %v90, %v234
  %v236 = vpop.f32.mrb[0].mxu0
  %237 = vmatprep.mubr.f32.mxu0 0.0
  %238 = vmatmul.mubr.f32.gmra.mrb[0].mxu0 %v108
  %v239 = vpop.f32.mrb[0].mxu0
  %v240 = vadd.f32 %v95, %v239
  %v241 = vpop.f32.mrb[0].mxu0
  %242 = vdwg.mxu0
  %v243 = vmax.f32 %v225, 0.0
  %v244 = vmax.f32 %v230, 0.0
  %v245 = vmax.f32 %v235, 0.0
  %v246 = vmax.f32 %v240, 0.0
  %v247 = vpack.c.bf16 %v244, %v243
  %v248 = vpack.c.bf16 %v246, %v245
  %250 = vset.pattern.permute.xlu0 0
  %251 = vperm.xlu0 %250, %v51
  %v252 = vpop.permute.xlu0 %251
  %255 = vset.pattern.permute.xlu0 0
  %256 = vperm.xlu0 %255, %v52
  %v257 = vpop.permute.xlu0 %256
  %260 = vset.pattern.permute.xlu0 0
  %261 = vperm.xlu0 %260, %v53
  %v262 = vpop.permute.xlu0 %261
  %265 = vset.pattern.permute.xlu0 0
  %266 = vperm.xlu0 %265, %v54
  %v267 = vpop.permute.xlu0 %266
  %v273 = vunpack.c.l.b16 %v37
  %v274 = vunpack.c.l.b16 %v38
  %v275 = vunpack.c.l.b16 %v39
  %v276 = vunpack.c.l.b16 %v40
  %v277 = vpack.c.b16 %v274, %v273
  %v278 = vpack.c.b16 %v276, %v275
  %vm279 = vcmask 261120
  %v281 = vsel %vm279, %v277, 0
  %v284 = vsel %vm279, %v278, 0
  %286 = vmatprep.subr.bf16.mxu0 0
  %287 = vmatpush1.bf16.msra.mxu0 %v247
  %288 = vmatprep.subr.bf16.mxu0 0
  %289 = vmatpush1.bf16.msra.mxu0 %v248
  %290 = vmatprep.subr.bf16.mxu0 0
  %291 = vmatpush1.bf16.msra.mxu0 0
  %292 = vmatprep.subr.bf16.mxu0 0
  %293 = vmatpush1.bf16.msra.mxu0 0
  %294 = vmatprep.subr.bf16.mxu0 0
  %295 = vmatpush1.bf16.msra.mxu0 0
  %296 = vmatprep.subr.bf16.mxu0 0
  %297 = vmatpush1.bf16.msra.mxu0 0
  %298 = vmatprep.subr.bf16.mxu0 0
  %299 = vmatpush1.bf16.msra.mxu0 0
  %300 = vmatprep.subr.bf16.mxu0 0
  %301 = vmatpush1.bf16.msra.mxu0 0
  %302 = vmatprep.subr.bf16.mxu0 0
  %303 = vmatpush1.bf16.msra.mxu0 0
  %304 = vmatprep.subr.bf16.mxu0 0
  %305 = vmatpush1.bf16.msra.mxu0 0
  %306 = vmatprep.subr.bf16.mxu0 0
  %307 = vmatpush1.bf16.msra.mxu0 0
  %308 = vmatprep.subr.bf16.mxu0 0
  %309 = vmatpush1.bf16.msra.mxu0 0
  %310 = vmatprep.subr.bf16.mxu0 0
  %311 = vmatpush1.bf16.msra.mxu0 0
  %312 = vmatprep.subr.bf16.mxu0 0
  %313 = vmatpush1.bf16.msra.mxu0 0
  %314 = vmatprep.subr.bf16.mxu0 0
  %315 = vmatpush1.bf16.msra.mxu0 0
  %316 = vmatprep.subr.bf16.mxu0 0
  %317 = vmatpush1.bf16.msra.mxu0 0
  %318 = vmatprep.mubr.bf16.mxu0 0
  %319 = vmatmul.mubr.bf16.gmra.mrb[0].mxu0 %v281
  %v320 = vpop.f32.mrb[0].mxu0
  %v321 = vadd.f32 %v252, %v320
  %v322 = vpop.f32.mrb[0].mxu0
  %v323 = vpop.f32.mrb[0].mxu0
  %v324 = vadd.f32 %v257, %v323
  %v325 = vpop.f32.mrb[0].mxu0
  %326 = vmatprep.mubr.bf16.mxu0 0
  %327 = vmatmul.mubr.bf16.gmra.mrb[0].mxu0 %v284
  %v328 = vpop.f32.mrb[0].mxu0
  %v329 = vadd.f32 %v262, %v328
  %v330 = vpop.f32.mrb[0].mxu0
  %v331 = vpop.f32.mrb[0].mxu0
  %v332 = vadd.f32 %v267, %v331
  %v333 = vpop.f32.mrb[0].mxu0
  %334 = vdwg.mxu0
  %v335 = vmax.f32 %v321, 0.0
  %v336 = vmax.f32 %v324, 0.0
  %v337 = vmax.f32 %v329, 0.0
  %v338 = vmax.f32 %v332, 0.0
  %v339 = vpack.c.bf16 %v336, %v335
  %v340 = vpack.c.bf16 %v338, %v337
  %342 = vset.pattern.permute.xlu0 0
  %343 = vperm.xlu0 %342, %v55
  %v344 = vpop.permute.xlu0 %343
  %347 = vset.pattern.permute.xlu0 0
  %348 = vperm.xlu0 %347, %v56
  %v349 = vpop.permute.xlu0 %348
  %352 = vset.pattern.permute.xlu0 0
  %353 = vperm.xlu0 %352, %v57
  %v354 = vpop.permute.xlu0 %353
  %357 = vset.pattern.permute.xlu0 0
  %358 = vperm.xlu0 %357, %v58
  %v359 = vpop.permute.xlu0 %358
  %v365 = vunpack.c.l.b16 %v41
  %v366 = vunpack.c.l.b16 %v42
  %v367 = vunpack.c.l.b16 %v43
  %v368 = vunpack.c.l.b16 %v44
  %v369 = vpack.c.b16 %v366, %v365
  %v370 = vpack.c.b16 %v368, %v367
  %v372 = vsel %vm279, %v369, 0
  %v375 = vsel %vm279, %v370, 0
  %377 = vmatprep.subr.bf16.mxu0 0
  %378 = vmatpush1.bf16.msra.mxu0 %v339
  %379 = vmatprep.subr.bf16.mxu0 0
  %380 = vmatpush1.bf16.msra.mxu0 %v340
  %381 = vmatprep.subr.bf16.mxu0 0
  %382 = vmatpush1.bf16.msra.mxu0 0
  %383 = vmatprep.subr.bf16.mxu0 0
  %384 = vmatpush1.bf16.msra.mxu0 0
  %385 = vmatprep.subr.bf16.mxu0 0
  %386 = vmatpush1.bf16.msra.mxu0 0
  %387 = vmatprep.subr.bf16.mxu0 0
  %388 = vmatpush1.bf16.msra.mxu0 0
  %389 = vmatprep.subr.bf16.mxu0 0
  %390 = vmatpush1.bf16.msra.mxu0 0
  %391 = vmatprep.subr.bf16.mxu0 0
  %392 = vmatpush1.bf16.msra.mxu0 0
  %393 = vmatprep.subr.bf16.mxu0 0
  %394 = vmatpush1.bf16.msra.mxu0 0
  %395 = vmatprep.subr.bf16.mxu0 0
  %396 = vmatpush1.bf16.msra.mxu0 0
  %397 = vmatprep.subr.bf16.mxu0 0
  %398 = vmatpush1.bf16.msra.mxu0 0
  %399 = vmatprep.subr.bf16.mxu0 0
  %400 = vmatpush1.bf16.msra.mxu0 0
  %401 = vmatprep.subr.bf16.mxu0 0
  %402 = vmatpush1.bf16.msra.mxu0 0
  %403 = vmatprep.subr.bf16.mxu0 0
  %404 = vmatpush1.bf16.msra.mxu0 0
  %405 = vmatprep.subr.bf16.mxu0 0
  %406 = vmatpush1.bf16.msra.mxu0 0
  %407 = vmatprep.subr.bf16.mxu0 0
  %408 = vmatpush1.bf16.msra.mxu0 0
  %409 = vmatprep.mubr.bf16.mxu0 0
  %410 = vmatmul.mubr.bf16.gmra.mrb[0].mxu0 %v372
  %v411 = vpop.f32.mrb[0].mxu0
  %v412 = vadd.f32 %v344, %v411
  %v413 = vpop.f32.mrb[0].mxu0
  %v414 = vpop.f32.mrb[0].mxu0
  %v415 = vadd.f32 %v349, %v414
  %v416 = vpop.f32.mrb[0].mxu0
  %417 = vmatprep.mubr.bf16.mxu0 0
  %418 = vmatmul.mubr.bf16.gmra.mrb[0].mxu0 %v375
  %v419 = vpop.f32.mrb[0].mxu0
  %v420 = vadd.f32 %v354, %v419
  %v421 = vpop.f32.mrb[0].mxu0
  %v422 = vpop.f32.mrb[0].mxu0
  %v423 = vadd.f32 %v359, %v422
  %v424 = vpop.f32.mrb[0].mxu0
  %425 = vdwg.mxu0
  %v426 = vmax.f32 %v412, 0.0
  %v427 = vmax.f32 %v415, 0.0
  %v428 = vmax.f32 %v420, 0.0
  %v429 = vmax.f32 %v423, 0.0
  %v430 = vpack.c.bf16 %v427, %v426
  %v431 = vpack.c.bf16 %v429, %v428
  %433 = vset.pattern.permute.xlu0 0
  %434 = vperm.xlu0 %433, %v59
  %v435 = vpop.permute.xlu0 %434
  %438 = vset.pattern.permute.xlu0 0
  %439 = vperm.xlu0 %438, %v60
  %v440 = vpop.permute.xlu0 %439
  %v444 = vunpack.c.l.b16 %v45
  %v445 = vunpack.c.l.b16 %v46
  %v446 = vpack.c.b16 %v445, %v444
  %v448 = vsel %vm279, %v446, 0
  %450 = vmatprep.subr.bf16.mxu0 0
  %451 = vmatpush1.bf16.msra.mxu0 %v430
  %452 = vmatprep.subr.bf16.mxu0 0
  %453 = vmatpush1.bf16.msra.mxu0 %v431
  %454 = vmatprep.subr.bf16.mxu0 0
  %455 = vmatpush1.bf16.msra.mxu0 0
  %456 = vmatprep.subr.bf16.mxu0 0
  %457 = vmatpush1.bf16.msra.mxu0 0
  %458 = vmatprep.subr.bf16.mxu0 0
  %459 = vmatpush1.bf16.msra.mxu0 0
  %460 = vmatprep.subr.bf16.mxu0 0
  %461 = vmatpush1.bf16.msra.mxu0 0
  %462 = vmatprep.subr.bf16.mxu0 0
  %463 = vmatpush1.bf16.msra.mxu0 0
  %464 = vmatprep.subr.bf16.mxu0 0
  %465 = vmatpush1.bf16.msra.mxu0 0
  %466 = vmatprep.subr.bf16.mxu0 0
  %467 = vmatpush1.bf16.msra.mxu0 0
  %468 = vmatprep.subr.bf16.mxu0 0
  %469 = vmatpush1.bf16.msra.mxu0 0
  %470 = vmatprep.subr.bf16.mxu0 0
  %471 = vmatpush1.bf16.msra.mxu0 0
  %472 = vmatprep.subr.bf16.mxu0 0
  %473 = vmatpush1.bf16.msra.mxu0 0
  %474 = vmatprep.subr.bf16.mxu0 0
  %475 = vmatpush1.bf16.msra.mxu0 0
  %476 = vmatprep.subr.bf16.mxu0 0
  %477 = vmatpush1.bf16.msra.mxu0 0
  %478 = vmatprep.subr.bf16.mxu0 0
  %479 = vmatpush1.bf16.msra.mxu0 0
  %480 = vmatprep.subr.bf16.mxu0 0
  %481 = vmatpush1.bf16.msra.mxu0 0
  %482 = vmatprep.mubr.bf16.mxu0 0
  %483 = vmatmul.mubr.bf16.gmra.mrb[0].mxu0 %v448
  %v484 = vpop.f32.mrb[0].mxu0
  %v485 = vadd.f32 %v435, %v484
  %v486 = vpop.f32.mrb[0].mxu0
  %v487 = vpop.f32.mrb[0].mxu0
  %v488 = vadd.f32 %v440, %v487
  %v489 = vpop.f32.mrb[0].mxu0
  %490 = vdwg.mxu0
  %491 = vxpose.xlu0.b32.start [1/16] %v485, 128
  %492 = vxpose.xlu0.b32.cont [2/16] %v488, 128
  %493 = vxpose.xlu0.b32.cont [3/16] 0.0, 128
  %494 = vxpose.xlu0.b32.cont [4/16] 0.0, 128
  %495 = vxpose.xlu0.b32.cont [5/16] 0.0, 128
  %496 = vxpose.xlu0.b32.cont [6/16] 0.0, 128
  %497 = vxpose.xlu0.b32.cont [7/16] 0.0, 128
  %498 = vxpose.xlu0.b32.cont [8/16] 0.0, 128
  %499 = vxpose.xlu0.b32.cont [9/16] 0.0, 128
  %500 = vxpose.xlu0.b32.cont [10/16] 0.0, 128
  %501 = vxpose.xlu0.b32.cont [11/16] 0.0, 128
  %502 = vxpose.xlu0.b32.cont [12/16] 0.0, 128
  %503 = vxpose.xlu0.b32.cont [13/16] 0.0, 128
  %504 = vxpose.xlu0.b32.cont [14/16] 0.0, 128
  %505 = vxpose.xlu0.b32.cont [15/16] 0.0, 128
  %506 = vxpose.xlu0.b32.end [16/16] 0.0, 128
  %v507 = vpop.trf.xlu0
  %v508 = vpop.trf.xlu0
  %v509 = vpop.trf.xlu0
  %v510 = vpop.trf.xlu0
  %v511 = vpop.trf.xlu0
  %v512 = vpop.trf.xlu0
  %v513 = vpop.trf.xlu0
  %v514 = vpop.trf.xlu0
  %v515 = vpop.trf.xlu0
  %v516 = vpop.trf.xlu0
  %v517 = vpop.trf.xlu0
  %v518 = vpop.trf.xlu0
  %v519 = vpop.trf.xlu0
  %v520 = vpop.trf.xlu0
  %v521 = vpop.trf.xlu0
  %v522 = vpop.trf.xlu0
  %523 = vst.msk [vmem:[%s9] sm:$0xff] %vm97, %v507
  %524 = vst.msk [vmem:[%s9 + $0x8] sm:$0xff] %vm97, %v508
  %525 = vst.msk [vmem:[%s9 + $0x10] sm:$0xff] %vm97, %v509
  %526 = vst.msk [vmem:[%s9 + $0x18] sm:$0xff] %vm97, %v510
  %527 = vst.msk [vmem:[%s9 + $0x20] sm:$0xff] %vm97, %v511
  %528 = vst.msk [vmem:[%s9 + $0x28] sm:$0xff] %vm97, %v512
  %529 = vst.msk [vmem:[%s9 + $0x30] sm:$0xff] %vm97, %v513
  %530 = vst.msk [vmem:[%s9 + $0x38] sm:$0xff] %vm97, %v514
  %531 = vst.msk [vmem:[%s9 + $0x40] sm:$0xff] %vm97, %v515
  %532 = vst.msk [vmem:[%s9 + $0x48] sm:$0xff] %vm97, %v516
  %533 = vst.msk [vmem:[%s9 + $0x50] sm:$0xff] %vm97, %v517
  %534 = vst.msk [vmem:[%s9 + $0x58] sm:$0xff] %vm97, %v518
  %535 = vst.msk [vmem:[%s9 + $0x60] sm:$0xff] %vm97, %v519
  %536 = vst.msk [vmem:[%s9 + $0x68] sm:$0xff] %vm97, %v520
  %537 = vst.msk [vmem:[%s9 + $0x70] sm:$0xff] %vm97, %v521
  %538 = vst.msk [vmem:[%s9 + $0x78] sm:$0xff] %vm97, %v522
  // Predicated region
  $region38: #{tictactoe_net_forward.1} parent=0 // pred_check
    _
  $region39: #{tictactoe_net_forward.1} parent=0 // pred_check_branch
    %540 = sbr.rel (0) target = $region41
  $region40: #{tictactoe_net_forward.1} parent=0 // pred_region
    _
  $region41: #{tictactoe_net_forward.1} parent=0 // pred_fallthru
    _
  // Predicated region
  $region42: #{tictactoe_net_forward.1} parent=0 // pred_check
    _
  $region43: #{tictactoe_net_forward.1} parent=0 // pred_check_branch
    %542 = sbr.rel (0) target = $region45
  $region44: #{tictactoe_net_forward.1} parent=0 // pred_region
    _
  $region45: #{tictactoe_net_forward.1} parent=0 // pred_fallthru
    _

</llo_original>
